<compile_context>
chip_gen: v7x
topology: tpu7x:2x2x1
jax: 0.10.0
libtpu: 0.0.40
codegen_flags: <defaults>
</compile_context>

<pallas_src>
import jax
import jax.numpy as jnp
import numpy as np
from jax.experimental import pallas as pl
from jax.experimental.pallas import tpu as pltpu


# -----------------------------------------------------------------------------
# Kernels
# -----------------------------------------------------------------------------
def _make_single_step_kernel(cfg, c_offsets, c_total, b_tile):
    """grid=(N//B_TILE,): pool whole H*W + fused matmul + sigmoid per batch tile."""
    n_t = len(cfg)

    def kernel(*refs):
        t_refs = refs[:n_t]
        w_ref = refs[n_t]          # (C_total, C_total) folded weights (resident)
        b_ref = refs[n_t + 1]      # (1, C_total) concatenated bias (resident)
        o_ref = refs[n_t + 2]      # (B_TILE, C_total) f32 gates (lane-dense)

        logits = jnp.broadcast_to(b_ref[...], (b_tile, c_total))
        for t_ref, off, cf in zip(t_refs, c_offsets, cfg):
            x = t_ref[...].astype(jnp.float32)        # cast BEFORE adds (v5e / accuracy)
            pooled = jnp.sum(x, axis=-1)              # (B_TILE, C_i): cross-lane reduce
            logits = logits + jnp.dot(                # (B_TILE, C_i) @ (C_i, C_total) -> MXU
                pooled, w_ref[off:off + cf["c"], :],
                preferred_element_type=jnp.float32)
        o_ref[...] = jax.nn.sigmoid(logits)           # EUP

    return kernel


def _make_multi_step_kernel(cfg, c_offsets, c_total, b_tile, n_steps):
    """grid=(N//B_TILE, n_steps): spatially-chunked fallback for very large H*W."""
    n_t = len(cfg)
    last = n_steps - 1

    def kernel(*refs):
        t_refs = refs[:n_t]
        w_ref = refs[n_t]
        b_ref = refs[n_t + 1]
        o_ref = refs[n_t + 2]
        acc_ref = refs[n_t + 3]    # (B_TILE, C_total) f32 logits accumulator
        s = pl.program_id(1)

        @pl.when(s == 0)
        def _init():
            acc_ref[...] = jnp.broadcast_to(b_ref[...], acc_ref.shape)

        step = jnp.zeros((b_tile, c_total), jnp.float32)
        for t_ref, off, cf in zip(t_refs, c_offsets, cfg):
            def contrib(t_ref=t_ref, off=off, c=cf["c"]):
                x = t_ref[...].astype(jnp.float32)
                pooled = jnp.sum(x, axis=-1)
                return jnp.dot(pooled, w_ref[off:off + c, :],
                               preferred_element_type=jnp.float32)

            if cf["chunked"]:
                step = step + contrib()               # every spatial step
            else:
                def _once(contrib=contrib):           # whole small tensor, once per row
                    acc_ref[...] = acc_ref[...] + contrib()
                pl.when(s == 0)(_once)
        acc_ref[...] = acc_ref[...] + step

        @pl.when(s == last)
        def _fin():
            o_ref[...] = jax.nn.sigmoid(acc_ref[...])

    return kernel


# -----------------------------------------------------------------------------
# Wrapper
# -----------------------------------------------------------------------------
def channel_att_bridge(ts, conv_w, lin_ws, lin_bs, *, expand=False,
                       vmem_budget_bytes=8 << 20):
    """ts: 5 NCHW arrays; conv_w: (3,); lin_ws[i]: (C_i, C_total); lin_bs[i]: (C_i,).

    Returns per-branch gates of shape (N, C_i, 1, 1) by default (expand=False);
    with expand=True the gates are broadcast to each t_i's shape (module-output
    fidelity — costs an extra N*C*H*W HBM write, avoid when the consumer can
    fuse the multiply)."""
    assert len(ts) == 5
    n = int(ts[0].shape[0])
    c_sizes = [int(t.shape[1]) for t in ts]
    c_total = sum(c_sizes)
    c_offsets = [int(o) for o in np.concatenate([[0], np.cumsum(c_sizes)[:-1]])]
    hws = [int(t.shape[2]) * int(t.shape[3]) for t in ts]

    # ---- resource planning --------------------------------------------------
    dbytes = [t.dtype.itemsize for t in ts]
    row_bytes = sum(c * hw * db for c, hw, db in zip(c_sizes, hws, dbytes))
    w_bytes = c_total * c_total * 4 + c_total * 4

    # Batch tile: largest divisor of N whose double-buffered blocks fit budget.
    avail = max(0, vmem_budget_bytes - 2 * w_bytes)
    cap = max(1, avail // max(1, 2 * row_bytes))
    b_tile = 1
    for d in range(1, n + 1):
        if n % d == 0 and d <= cap:
            b_tile = d
    # TODO(synk): on v7x prefer N // b_tile >= 2 (when N allows) so the
    # "parallel" batch axis can be split across the two TensorCores.

    # Spatial tiling only if even a single batch row does not fit the budget.
    def _tiles(n_steps):
        out = []
        for hw in hws:
            if n_steps > 1 and hw % n_steps == 0 and (hw // n_steps) % 128 == 0:
                out.append(hw // n_steps)
            else:
                out.append(hw)
        return out

    n_steps = 1
    if b_tile == 1 and 2 * row_bytes + 2 * w_bytes > vmem_budget_bytes:
        hw_max = max(hws)
        for cand in range(2, hw_max // 128 + 1):
            if hw_max % cand or (hw_max // cand) % 128:
                continue
            tiles_c = _tiles(cand)
            sb = sum(c * t * db for c, t, db in zip(c_sizes, tiles_c, dbytes))
            if 2 * sb + 2 * w_bytes <= vmem_budget_bytes:
                n_steps = cand
                break
    tiles = _tiles(n_steps)
    cfg = [dict(c=c, hw=hw, tile=tile, chunked=(tile != hw))
           for c, hw, tile in zip(c_sizes, hws, tiles)]

    # ---- weight prep: fold mean(1/HW) and Conv1d(1,1,3,pad=1) into the linears
    f32 = jnp.float32
    w_cat = jnp.concatenate([jnp.asarray(w).T.astype(f32) for w in lin_ws], axis=1)  # (Ct, Ct)
    b_cat = jnp.concatenate([jnp.asarray(b).astype(f32) for b in lin_bs]).reshape(1, c_total)
    cw = jnp.asarray(conv_w).astype(f32).reshape(3)
    zrow = jnp.zeros((1, c_total), f32)
    w_up = jnp.concatenate([w_cat[1:, :], zrow], axis=0)       # row j -> W_cat[j+1]
    w_dn = jnp.concatenate([zrow, w_cat[:-1, :]], axis=0)      # row j -> W_cat[j-1]
    w_eff = cw[0] * w_up + cw[1] * w_cat + cw[2] * w_dn        # conv folded in
    inv_hw = np.concatenate([np.full((c,), 1.0 / hw, np.float32)
                             for c, hw in zip(c_sizes, hws)])
    w_eff = w_eff * jnp.asarray(inv_hw)[:, None]               # mean folded in

    # ---- inputs: flatten spatial only; native dtype into the kernel ----------
    flat = [t.reshape(t.shape[0], t.shape[1], -1) for t in ts]
    vmem_limit = int(min(128 << 20, max(16 << 20, 2 * vmem_budget_bytes)))

    if n_steps == 1:
        in_specs = [pl.BlockSpec((b_tile, cf["c"], cf["tile"]), lambda b: (b, 0, 0))
                    for cf in cfg]
        in_specs.append(pl.BlockSpec((c_total, c_total), lambda b: (0, 0)))  # W_eff resident
        in_specs.append(pl.BlockSpec((1, c_total), lambda b: (0, 0)))        # bias resident
        out_spec = pl.BlockSpec((b_tile, c_total), lambda b: (b, 0))
        kernel = _make_single_step_kernel(cfg, c_offsets, c_total, b_tile)
        gates = pl.pallas_call(
            kernel,
            out_shape=jax.ShapeDtypeStruct((n, c_total), jnp.float32),
            grid=(n // b_tile,),
            in_specs=in_specs,
            out_specs=out_spec,
            compiler_params=pltpu.CompilerParams(
                dimension_semantics=("parallel",),
                vmem_limit_bytes=vmem_limit),
        )(*flat, w_eff, b_cat)
    else:
        def mk_map(chunked):
            return (lambda b, s: (b, 0, s)) if chunked else (lambda b, s: (b, 0, 0))
        in_specs = [pl.BlockSpec((b_tile, cf["c"], cf["tile"]), mk_map(cf["chunked"]))
                    for cf in cfg]
        in_specs.append(pl.BlockSpec((c_total, c_total), lambda b, s: (0, 0)))
        in_specs.append(pl.BlockSpec((1, c_total), lambda b, s: (0, 0)))
        out_spec = pl.BlockSpec((b_tile, c_total), lambda b, s: (b, 0))
        kernel = _make_multi_step_kernel(cfg, c_offsets, c_total, b_tile, n_steps)
        gates = pl.pallas_call(
            kernel,
            out_shape=jax.ShapeDtypeStruct((n, c_total), jnp.float32),
            grid=(n // b_tile, n_steps),
            in_specs=in_specs,
            out_specs=out_spec,
            scratch_shapes=[pltpu.VMEM((b_tile, c_total), jnp.float32)],
            compiler_params=pltpu.CompilerParams(
                dimension_semantics=("parallel", "arbitrary"),
                vmem_limit_bytes=vmem_limit),
        )(*flat, w_eff, b_cat)

    per_branch = [gates[:, off:off + c].reshape(n, c, 1, 1).astype(t.dtype)
                  for off, c, t in zip(c_offsets, c_sizes, ts)]
    if not expand:
        return tuple(per_branch)
    # Module-output fidelity: expand_as (in PyTorch this is a zero-stride view).
    return tuple(jnp.broadcast_to(g, t.shape) for g, t in zip(per_branch, ts))


# -----------------------------------------------------------------------------
# Pure-JAX reference (matches the PyTorch forward, split_att='fc')
# -----------------------------------------------------------------------------
def reference(ts, conv_w, lin_ws, lin_bs):
    pooled = jnp.concatenate(
        [t.reshape(t.shape[0], t.shape[1], -1).mean(-1) for t in ts], axis=1)   # (N, C_total)
    xp = jnp.pad(pooled, ((0, 0), (1, 1)))
    att = conv_w[0] * xp[:, :-2] + conv_w[1] * xp[:, 1:-1] + conv_w[2] * xp[:, 2:]
    outs = []
    for t, w, b in zip(ts, lin_ws, lin_bs):
        g = jax.nn.sigmoid(att @ w.T + b)                                        # (N, C_i)
        outs.append(jnp.broadcast_to(g[:, :, None, None], t.shape))
    return tuple(outs)


if __name__ == "__main__":
    key = jax.random.PRNGKey(0)
    # c_list has 6 entries in the module; the last one is unused by forward().
    c_list = [8, 16, 24, 32, 48, 64]
    c_sum = sum(c_list) - c_list[-1]          # 128
    spatial = [32, 16, 16, 8, 8]
    n = 2

    keys = jax.random.split(key, 16)
    ts = [jax.random.normal(keys[i], (n, c_list[i], spatial[i], spatial[i]), jnp.float32)
          for i in range(5)]
    conv_w = jax.random.normal(keys[5], (1, 1, 3), jnp.float32) * 0.5            # Conv1d(1,1,3)
    lin_ws = [jax.random.normal(keys[6 + i], (c_list[i], c_sum), jnp.float32)
              / np.sqrt(c_sum) for i in range(5)]                                # Linear(c_sum, c_i)
    lin_bs = [jax.random.normal(keys[11 + i], (c_list[i],), jnp.float32) * 0.1
              for i in range(5)]

    refs = reference(ts, conv_w[0, 0], lin_ws, lin_bs)

    # Fast path: single grid step per batch tile, gates only (no expand write).
    gates = channel_att_bridge(ts, conv_w[0, 0], lin_ws, lin_bs)
    gates = jax.block_until_ready(gates)
    for g, r, t in zip(gates, refs, ts):
        assert g.shape == (n, t.shape[1], 1, 1) and g.dtype == t.dtype
        np.testing.assert_allclose(np.asarray(jnp.broadcast_to(g, t.shape)),
                                   np.asarray(r), rtol=2e-3, atol=2e-3)

    # Module-output fidelity path (expand=True) — same semantics as the module.
    outs = channel_att_bridge(ts, conv_w[0, 0], lin_ws, lin_bs, expand=True)
    outs = jax.block_until_ready(outs)
    for o, r, t in zip(outs, refs, ts):
        assert o.shape == t.shape and o.dtype == t.dtype
        np.testing.assert_allclose(np.asarray(o), np.asarray(r), rtol=2e-3, atol=2e-3)

    # Exercise the spatially-chunked fallback (tiny VMEM budget forces n_steps>1).
    gates_chunked = channel_att_bridge(ts, conv_w[0, 0], lin_ws, lin_bs,
                                       vmem_budget_bytes=300 * 1024)
    gates_chunked = jax.block_until_ready(gates_chunked)
    for g, r, t in zip(gates_chunked, refs, ts):
        np.testing.assert_allclose(np.asarray(jnp.broadcast_to(g, t.shape)),
                                   np.asarray(r), rtol=2e-3, atol=2e-3)

    print("KERNEL_OK")
</pallas_src>

<mosaic_0001>
module attributes {stable_mosaic.version = 11 : i64} {
  func.func @kernel(%arg0: i32, %arg1: memref<2x8x1024xf32, #tpu.memory_space<vmem>>, %arg2: memref<2x16x256xf32, #tpu.memory_space<vmem>>, %arg3: memref<2x24x256xf32, #tpu.memory_space<vmem>>, %arg4: memref<2x32x64xf32, #tpu.memory_space<vmem>>, %arg5: memref<2x48x64xf32, #tpu.memory_space<vmem>>, %arg6: memref<128x128xf32, #tpu.memory_space<vmem>>, %arg7: memref<1x128xf32, #tpu.memory_space<vmem>>, %arg8: memref<2x128xf32, #tpu.memory_space<vmem>>) attributes {dimension_semantics = [#tpu.dimension_semantics<parallel>], iteration_bounds = array<i64: 1>, scalar_prefetch = 0 : i64, scratch_operands = 0 : i64, tpu.core_type = #tpu.core_type<tc>, window_params = [{transform_indices = @transform_0, window_bounds = array<i64: 2, 8, 1024>}, {transform_indices = @transform_1, window_bounds = array<i64: 2, 16, 256>}, {transform_indices = @transform_2, window_bounds = array<i64: 2, 24, 256>}, {transform_indices = @transform_3, window_bounds = array<i64: 2, 32, 64>}, {transform_indices = @transform_4, window_bounds = array<i64: 2, 48, 64>}, {pipeline_mode = #tpu.pipeline_mode<synchronous>, transform_indices = @transform_5, window_bounds = array<i64: 128, 128>}, {pipeline_mode = #tpu.pipeline_mode<synchronous>, transform_indices = @transform_6, window_bounds = array<i64: 1, 128>}, {transform_indices = @transform_7, window_bounds = array<i64: 2, 128>}]} {
    %c0 = arith.constant 0 : index
    %c0_0 = arith.constant 0 : index
    %0 = vector.load %arg7[%c0, %c0_0] : memref<1x128xf32, #tpu.memory_space<vmem>>, vector<1x128xf32>
    %1 = vector.shape_cast %0 : vector<1x128xf32> to vector<1x128xf32>
    %2 = vector.broadcast %1 : vector<1x128xf32> to vector<2x128xf32>
    %c0_1 = arith.constant 0 : index
    %c0_2 = arith.constant 0 : index
    %c0_3 = arith.constant 0 : index
    %3 = vector.load %arg1[%c0_1, %c0_2, %c0_3] : memref<2x8x1024xf32, #tpu.memory_space<vmem>>, vector<2x8x1024xf32>
    %cst = arith.constant dense<0.000000e+00> : vector<2x8xf32>
    %4 = vector.multi_reduction <add>, %3, %cst [2] : vector<2x8x1024xf32> to vector<2x8xf32>
    %c0_4 = arith.constant 0 : index
    %c0_5 = arith.constant 0 : index
    %5 = vector.load %arg6[%c0_4, %c0_5] : memref<128x128xf32, #tpu.memory_space<vmem>>, vector<8x128xf32>
    %cst_6 = arith.constant dense<0.000000e+00> : vector<2x128xf32>
    %6 = tpu.matmul %4, %5, %cst_6 {dimension_numbers = #tpu.dot_dimension_numbers<[1], [0], [0], [1], [0, 0, 1, 1], [], []>} : vector<2x8xf32>, vector<8x128xf32>, vector<2x128xf32> -> vector<2x128xf32>
    %7 = arith.addf %2, %6 : vector<2x128xf32>
    %c0_7 = arith.constant 0 : index
    %c0_8 = arith.constant 0 : index
    %c0_9 = arith.constant 0 : index
    %8 = vector.load %arg2[%c0_7, %c0_8, %c0_9] : memref<2x16x256xf32, #tpu.memory_space<vmem>>, vector<2x16x256xf32>
    %cst_10 = arith.constant dense<0.000000e+00> : vector<2x16xf32>
    %9 = vector.multi_reduction <add>, %8, %cst_10 [2] : vector<2x16x256xf32> to vector<2x16xf32>
    %c8 = arith.constant 8 : index
    %c0_11 = arith.constant 0 : index
    %10 = vector.load %arg6[%c8, %c0_11] : memref<128x128xf32, #tpu.memory_space<vmem>>, vector<16x128xf32>
    %cst_12 = arith.constant dense<0.000000e+00> : vector<2x128xf32>
    %11 = tpu.matmul %9, %10, %cst_12 {dimension_numbers = #tpu.dot_dimension_numbers<[1], [0], [0], [1], [0, 0, 1, 1], [], []>} : vector<2x16xf32>, vector<16x128xf32>, vector<2x128xf32> -> vector<2x128xf32>
    %12 = arith.addf %7, %11 : vector<2x128xf32>
    %c0_13 = arith.constant 0 : index
    %c0_14 = arith.constant 0 : index
    %c0_15 = arith.constant 0 : index
    %13 = vector.load %arg3[%c0_13, %c0_14, %c0_15] : memref<2x24x256xf32, #tpu.memory_space<vmem>>, vector<2x24x256xf32>
    %cst_16 = arith.constant dense<0.000000e+00> : vector<2x24xf32>
    %14 = vector.multi_reduction <add>, %13, %cst_16 [2] : vector<2x24x256xf32> to vector<2x24xf32>
    %c24 = arith.constant 24 : index
    %c0_17 = arith.constant 0 : index
    %15 = vector.load %arg6[%c24, %c0_17] : memref<128x128xf32, #tpu.memory_space<vmem>>, vector<24x128xf32>
    %cst_18 = arith.constant dense<0.000000e+00> : vector<2x128xf32>
    %16 = tpu.matmul %14, %15, %cst_18 {dimension_numbers = #tpu.dot_dimension_numbers<[1], [0], [0], [1], [0, 0, 1, 1], [], []>} : vector<2x24xf32>, vector<24x128xf32>, vector<2x128xf32> -> vector<2x128xf32>
    %17 = arith.addf %12, %16 : vector<2x128xf32>
    %c0_19 = arith.constant 0 : index
    %c0_20 = arith.constant 0 : index
    %c0_21 = arith.constant 0 : index
    %18 = vector.load %arg4[%c0_19, %c0_20, %c0_21] : memref<2x32x64xf32, #tpu.memory_space<vmem>>, vector<2x32x64xf32>
    %cst_22 = arith.constant dense<0.000000e+00> : vector<2x32xf32>
    %19 = vector.multi_reduction <add>, %18, %cst_22 [2] : vector<2x32x64xf32> to vector<2x32xf32>
    %c48 = arith.constant 48 : index
    %c0_23 = arith.constant 0 : index
    %20 = vector.load %arg6[%c48, %c0_23] : memref<128x128xf32, #tpu.memory_space<vmem>>, vector<32x128xf32>
    %cst_24 = arith.constant dense<0.000000e+00> : vector<2x128xf32>
    %21 = tpu.matmul %19, %20, %cst_24 {dimension_numbers = #tpu.dot_dimension_numbers<[1], [0], [0], [1], [0, 0, 1, 1], [], []>} : vector<2x32xf32>, vector<32x128xf32>, vector<2x128xf32> -> vector<2x128xf32>
    %22 = arith.addf %17, %21 : vector<2x128xf32>
    %c0_25 = arith.constant 0 : index
    %c0_26 = arith.constant 0 : index
    %c0_27 = arith.constant 0 : index
    %23 = vector.load %arg5[%c0_25, %c0_26, %c0_27] : memref<2x48x64xf32, #tpu.memory_space<vmem>>, vector<2x48x64xf32>
    %cst_28 = arith.constant dense<0.000000e+00> : vector<2x48xf32>
    %24 = vector.multi_reduction <add>, %23, %cst_28 [2] : vector<2x48x64xf32> to vector<2x48xf32>
    %c80 = arith.constant 80 : index
    %c0_29 = arith.constant 0 : index
    %25 = vector.load %arg6[%c80, %c0_29] : memref<128x128xf32, #tpu.memory_space<vmem>>, vector<48x128xf32>
    %cst_30 = arith.constant dense<0.000000e+00> : vector<2x128xf32>
    %26 = tpu.matmul %24, %25, %cst_30 {dimension_numbers = #tpu.dot_dimension_numbers<[1], [0], [0], [1], [0, 0, 1, 1], [], []>} : vector<2x48xf32>, vector<48x128xf32>, vector<2x128xf32> -> vector<2x128xf32>
    %27 = arith.addf %22, %26 : vector<2x128xf32>
    %28 = arith.negf %27 : vector<2x128xf32>
    %29 = math.exp %28 : vector<2x128xf32>
    %cst_31 = arith.constant 1.000000e+00 : f32
    %30 = vector.broadcast %cst_31 : f32 to vector<2x128xf32>
    %31 = arith.addf %30, %29 : vector<2x128xf32>
    %32 = arith.divf %30, %31 : vector<2x128xf32>
    %c0_32 = arith.constant 0 : index
    %c0_33 = arith.constant 0 : index
    %33 = vector.load %arg8[%c0_32, %c0_33] : memref<2x128xf32, #tpu.memory_space<vmem>>, vector<2x128xf32>
    tpu.vector_store %arg8[%c0_32, %c0_33], %32 {strides = array<i32>} : memref<2x128xf32, #tpu.memory_space<vmem>>, vector<2x128xf32>,
    return
  }
  func.func @transform_0(%arg0: i32) -> (i32, i32, i32) {
    %c0_i32 = arith.constant 0 : i32
    %c0_i32_0 = arith.constant 0 : i32
    %c0_i32_1 = arith.constant 0 : i32
    return %arg0, %c0_i32, %c0_i32_0 : i32, i32, i32
  }
  func.func @transform_1(%arg0: i32) -> (i32, i32, i32) {
    %c0_i32 = arith.constant 0 : i32
    %c0_i32_0 = arith.constant 0 : i32
    %c0_i32_1 = arith.constant 0 : i32
    return %arg0, %c0_i32, %c0_i32_0 : i32, i32, i32
  }
  func.func @transform_2(%arg0: i32) -> (i32, i32, i32) {
    %c0_i32 = arith.constant 0 : i32
    %c0_i32_0 = arith.constant 0 : i32
    %c0_i32_1 = arith.constant 0 : i32
    return %arg0, %c0_i32, %c0_i32_0 : i32, i32, i32
  }
  func.func @transform_3(%arg0: i32) -> (i32, i32, i32) {
    %c0_i32 = arith.constant 0 : i32
    %c0_i32_0 = arith.constant 0 : i32
    %c0_i32_1 = arith.constant 0 : i32
    return %arg0, %c0_i32, %c0_i32_0 : i32, i32, i32
  }
  func.func @transform_4(%arg0: i32) -> (i32, i32, i32) {
    %c0_i32 = arith.constant 0 : i32
    %c0_i32_0 = arith.constant 0 : i32
    %c0_i32_1 = arith.constant 0 : i32
    return %arg0, %c0_i32, %c0_i32_0 : i32, i32, i32
  }
  func.func @transform_5(%arg0: i32) -> (i32, i32) {
    %c0_i32 = arith.constant 0 : i32
    %c0_i32_0 = arith.constant 0 : i32
    %c0_i32_1 = arith.constant 0 : i32
    return %c0_i32, %c0_i32_0 : i32, i32
  }
  func.func @transform_6(%arg0: i32) -> (i32, i32) {
    %c0_i32 = arith.constant 0 : i32
    %c0_i32_0 = arith.constant 0 : i32
    %c0_i32_1 = arith.constant 0 : i32
    return %c0_i32, %c0_i32_0 : i32, i32
  }
  func.func @transform_7(%arg0: i32) -> (i32, i32) {
    %c0_i32 = arith.constant 0 : i32
    %c0_i32_0 = arith.constant 0 : i32
    return %arg0, %c0_i32 : i32, i32
  }
}

</mosaic_0001>

<llo_original>
// kernel: tpu_custom_call.1
$region0: #{tpu_custom_call.1}
  #allocation0 [shape = 'u32[]', space=smem, size = 0x4, offset = 0x4, fixed_abs, tag = 'smem constant byte address 0x4 - core index']
  #allocation1 [shape = 'u32[144,128]{1,0:T(1,128)}', space=vmem, size = 0x12000, scoped, tag = 'internal scratch']
  %s0 = inlined_call_operand.hbm [shape: f32[2,8,1024], index: 0, kind: input, shape index: {}]
  %s1 = inlined_call_operand.hbm [shape: f32[2,16,256], index: 1, kind: input, shape index: {}]
  %s2 = inlined_call_operand.hbm [shape: f32[2,24,256], index: 2, kind: input, shape index: {}]
  %s3 = inlined_call_operand.hbm [shape: f32[2,32,64], index: 3, kind: input, shape index: {}]
  %s4 = inlined_call_operand.hbm [shape: f32[2,48,64], index: 4, kind: input, shape index: {}]
  %s5 = inlined_call_operand.hbm [shape: f32[128,128], index: 5, kind: input, shape index: {}]
  %s6 = inlined_call_operand.vmem [shape: f32[1,128], index: 6, kind: input, shape index: {}]
  %s7 = inlined_call_operand.hbm [shape: f32[2,128], index: 7, kind: output, shape index: {}]
  %s8 = sld [smem:[#allocation0]]
  $region62: #{tpu_custom_call.1} parent=0
    _
  %s10 = ssub.s32 1, %s8
  %s11 = scalar_select 0, %s10, %s8
  $region1: #{tpu_custom_call.1} parent=0
    #allocation2 [shape = 'u8[65536]{0}', space=vmem, size = 0x10000, scoped, tag = 'input window, operand 0, single buffered']
    #allocation3 [shape = 's32[1]{0}', space=sflag, size = 0x4, scoped, tag = 'scoped memory for tpu_custom_call.1']
    #allocation4 [shape = 's32[1]{0}', space=sflag, size = 0x4, scoped, tag = 'scoped memory for tpu_custom_call.1']
    #allocation5 [shape = 'u8[32768]{0}', space=vmem, size = 0x8000, scoped, tag = 'input window, operand 1, single buffered']
    #allocation6 [shape = 's32[1]{0}', space=sflag, size = 0x4, scoped, tag = 'scoped memory for tpu_custom_call.1']
    #allocation7 [shape = 'u8[49152]{0}', space=vmem, size = 0xc000, scoped, tag = 'input window, operand 2, single buffered']
    #allocation8 [shape = 'u8[32768]{0}', space=vmem, size = 0x8000, scoped, tag = 'input window, operand 3, single buffered']
    #allocation9 [shape = 's32[1]{0}', space=sflag, size = 0x4, scoped, tag = 'scoped memory for tpu_custom_call.1']
    #allocation10 [shape = 'u8[49152]{0}', space=vmem, size = 0xc000, scoped, tag = 'input window, operand 4, single buffered']
    #allocation11 [shape = 'u8[65536]{0}', space=vmem, size = 0x10000, scoped, tag = 'input window, operand 5, single buffered']
    #allocation12 [shape = 's32[1]{0}', space=sflag, size = 0x4, scoped, tag = 'scoped memory for tpu_custom_call.1']
    #allocation13 [shape = 'u8[1024]{0}', space=vmem, size = 0x400, scoped, tag = 'output window, operand 0, single buffered']
    %12 = vsyncpa [#allocation3], 0
    %13 = vsyncpa [#allocation6], 0
    %14 = vsyncpa [#allocation9], 0
    %15 = vsyncpa [#allocation12], 0
    %16 = vsyncpa [#allocation4], 0
    // Predicated region
    $region2: #{tpu_custom_call.1} parent=1 // pred_check
      _
    $region3: #{tpu_custom_call.1} parent=1 // pred_check_branch
      %18 = sbr.rel (0) target = $region5
    $region4: #{tpu_custom_call.1} parent=1 // pred_region
      %s20 = ssub.s32 2048, 2048
      %21 = vsyncadd [#allocation3], %s20
      %s22 = sshll.u32 [#allocation2], 4
      %s23 = int_to_ptr.vmem [resolvable:$true] %s22
      %28 = dma.hbm_to_vmem [thread:$0]  %s0, 2048, %s23, [#allocation3], 1024, 1024, 64
    $region5: #{tpu_custom_call.1} parent=1 // pred_fallthru
      _
    // Predicated region
    $region6: #{tpu_custom_call.1} parent=1 // pred_check
      _
    $region7: #{tpu_custom_call.1} parent=1 // pred_check_branch
      %30 = sbr.rel (0) target = $region9
    $region8: #{tpu_custom_call.1} parent=1 // pred_region
      %s32 = ssub.s32 1024, 1024
      %33 = vsyncadd [#allocation6], %s32
      %s34 = sshll.u32 [#allocation5], 4
      %s35 = int_to_ptr.vmem [resolvable:$true] %s34
      %40 = dma.hbm_to_vmem [thread:$0]  %s1, 1024, %s35, [#allocation6], 256, 256, 16
    $region9: #{tpu_custom_call.1} parent=1 // pred_fallthru
      _
    // Predicated region
    $region10: #{tpu_custom_call.1} parent=1 // pred_check
      _
    $region11: #{tpu_custom_call.1} parent=1 // pred_check_branch
      %42 = sbr.rel (0) target = $region13
    $region12: #{tpu_custom_call.1} parent=1 // pred_region
      %s44 = ssub.s32 1536, 1536
      %45 = vsyncadd [#allocation6], %s44
      %s46 = sshll.u32 [#allocation7], 4
      %s47 = int_to_ptr.vmem [resolvable:$true] %s46
      %52 = dma.hbm_to_vmem [thread:$0]  %s2, 1536, %s47, [#allocation6], 256, 256, 16
    $region13: #{tpu_custom_call.1} parent=1 // pred_fallthru
      _
    // Predicated region
    $region14: #{tpu_custom_call.1} parent=1 // pred_check
      _
    $region15: #{tpu_custom_call.1} parent=1 // pred_check_branch
      %54 = sbr.rel (0) target = $region17
    $region16: #{tpu_custom_call.1} parent=1 // pred_region
      %s56 = ssub.s32 1024, 1024
      %57 = vsyncadd [#allocation9], %s56
      %s58 = sshll.u32 [#allocation8], 4
      %s59 = int_to_ptr.vmem [resolvable:$true] %s58
      %64 = dma.hbm_to_vmem [thread:$0]  %s3, 1024, %s59, [#allocation9], 128, 128, 8
    $region17: #{tpu_custom_call.1} parent=1 // pred_fallthru
      _
    // Predicated region
    $region18: #{tpu_custom_call.1} parent=1 // pred_check
      _
    $region19: #{tpu_custom_call.1} parent=1 // pred_check_branch
      %66 = sbr.rel (0) target = $region21
    $region20: #{tpu_custom_call.1} parent=1 // pred_region
      %s68 = ssub.s32 1536, 1536
      %69 = vsyncadd [#allocation9], %s68
      %s70 = sshll.u32 [#allocation10], 4
      %s71 = int_to_ptr.vmem [resolvable:$true] %s70
      %76 = dma.hbm_to_vmem [thread:$0]  %s4, 1536, %s71, [#allocation9], 128, 128, 8
    $region21: #{tpu_custom_call.1} parent=1 // pred_fallthru
      _
    // Predicated region
    $region22: #{tpu_custom_call.1} parent=1 // pred_check
      _
    $region23: #{tpu_custom_call.1} parent=1 // pred_check_branch
      %78 = sbr.rel (0) target = $region25
    $region24: #{tpu_custom_call.1} parent=1 // pred_region
      %s80 = ssub.s32 2048, 2048
      %81 = vsyncadd [#allocation12], %s80
      %s82 = sshll.u32 [#allocation11], 4
      %s83 = int_to_ptr.vmem [resolvable:$true] %s82
      %88 = dma.hbm_to_vmem [thread:$0]  %s5, 2048, %s83, [#allocation12], 128, 128, 8
    $region25: #{tpu_custom_call.1} parent=1 // pred_fallthru
      _
    // Predicated region
    $region26: #{tpu_custom_call.1} parent=1 // pred_check
      _
    $region27: #{tpu_custom_call.1} parent=1 // pred_check_branch
      %90 = sbr.rel (0) target = $region29
    $region28: #{tpu_custom_call.1} parent=1 // pred_region
      _
    $region29: #{tpu_custom_call.1} parent=1 // pred_fallthru
      _
    // Predicated region
    $region30: #{tpu_custom_call.1} parent=1 // pred_check
      _
    $region31: #{tpu_custom_call.1} parent=1 // pred_check_branch
      %92 = sbr.rel (0) target = $region33
    $region32: #{tpu_custom_call.1} parent=1 // pred_region
      %93 = dma.done [#allocation3], 2048
    $region33: #{tpu_custom_call.1} parent=1 // pred_fallthru
      _
    // Predicated region
    $region34: #{tpu_custom_call.1} parent=1 // pred_check
      _
    $region35: #{tpu_custom_call.1} parent=1 // pred_check_branch
      %95 = sbr.rel (0) target = $region37
    $region36: #{tpu_custom_call.1} parent=1 // pred_region
      %96 = dma.done [#allocation6], 1024
    $region37: #{tpu_custom_call.1} parent=1 // pred_fallthru
      _
    // Predicated region
    $region38: #{tpu_custom_call.1} parent=1 // pred_check
      _
    $region39: #{tpu_custom_call.1} parent=1 // pred_check_branch
      %98 = sbr.rel (0) target = $region41
    $region40: #{tpu_custom_call.1} parent=1 // pred_region
      %99 = dma.done [#allocation6], 1536
    $region41: #{tpu_custom_call.1} parent=1 // pred_fallthru
      _
    // Predicated region
    $region42: #{tpu_custom_call.1} parent=1 // pred_check
      _
    $region43: #{tpu_custom_call.1} parent=1 // pred_check_branch
      %101 = sbr.rel (0) target = $region45
    $region44: #{tpu_custom_call.1} parent=1 // pred_region
      %102 = dma.done [#allocation9], 1024
    $region45: #{tpu_custom_call.1} parent=1 // pred_fallthru
      _
    // Predicated region
    $region46: #{tpu_custom_call.1} parent=1 // pred_check
      _
    $region47: #{tpu_custom_call.1} parent=1 // pred_check_branch
      %104 = sbr.rel (0) target = $region49
    $region48: #{tpu_custom_call.1} parent=1 // pred_region
      %105 = dma.done [#allocation9], 1536
    $region49: #{tpu_custom_call.1} parent=1 // pred_fallthru
      _
    // Predicated region
    $region50: #{tpu_custom_call.1} parent=1 // pred_check
      _
    $region51: #{tpu_custom_call.1} parent=1 // pred_check_branch
      %107 = sbr.rel (0) target = $region53
    $region52: #{tpu_custom_call.1} parent=1 // pred_region
      %108 = dma.done [#allocation12], 2048
    $region53: #{tpu_custom_call.1} parent=1 // pred_fallthru
      _
    %v109 = vld [vmem:[%s6] sm:$0x1]
    %v111 = vlaneseq
    %v112 = vshrl.u32 %v111, 7
    %v113 = vsub.s32 0, %v112
    %v114 = vrot.slane %v109, %v113
    %v116 = vld [vmem:[#allocation2] sm:$0xff]
    %v117 = vld [vmem:[#allocation2 + $0x8] sm:$0xff]
    %v118 = vld [vmem:[#allocation2 + $0x10] sm:$0xff]
    %v119 = vld [vmem:[#allocation2 + $0x18] sm:$0xff]
    %v120 = vld [vmem:[#allocation2 + $0x20] sm:$0xff]
    %v121 = vld [vmem:[#allocation2 + $0x28] sm:$0xff]
    %v122 = vld [vmem:[#allocation2 + $0x30] sm:$0xff]
    %v123 = vld [vmem:[#allocation2 + $0x38] sm:$0xff]
    %v124 = vld [vmem:[#allocation2 + $0x40] sm:$0xff]
    %v125 = vld [vmem:[#allocation2 + $0x48] sm:$0xff]
    %v126 = vld [vmem:[#allocation2 + $0x50] sm:$0xff]
    %v127 = vld [vmem:[#allocation2 + $0x58] sm:$0xff]
    %v128 = vld [vmem:[#allocation2 + $0x60] sm:$0xff]
    %v129 = vld [vmem:[#allocation2 + $0x68] sm:$0xff]
    %v130 = vld [vmem:[#allocation2 + $0x70] sm:$0xff]
    %v131 = vld [vmem:[#allocation2 + $0x78] sm:$0xff]
    %v132 = vadd.f32 %v116, %v117
    %v133 = vadd.f32 %v132, %v118
    %v134 = vadd.f32 %v133, %v119
    %v135 = vadd.f32 %v134, %v120
    %v136 = vadd.f32 %v135, %v121
    %v137 = vadd.f32 %v136, %v122
    %v138 = vadd.f32 %v137, %v123
    %139 = vadd.xlane.f32.xlu0 %v138
    %v140 = vpop.xlane.xlu0 %139
    %v141 = vadd.f32 %v124, %v125
    %v142 = vadd.f32 %v141, %v126
    %v143 = vadd.f32 %v142, %v127
    %v144 = vadd.f32 %v143, %v128
    %v145 = vadd.f32 %v144, %v129
    %v146 = vadd.f32 %v145, %v130
    %v147 = vadd.f32 %v146, %v131
    %148 = vadd.xlane.f32.xlu0 %v147
    %v149 = vpop.xlane.xlu0 %148
    %v150 = vld [vmem:[#allocation11] sm:$0xff]
    %v153 = vlaneseq
    %v154 = vand.u32 %v153, 127
    %v155 = vlaneseq
    %v156 = vshrl.u32 %v155, 7
    %v157 = vsub.s32 %v154, %v156
    %v158 = vrot.slane %v140, %v157
    %v159 = vlaneseq
    %v160 = vshrl.u32 %v159, 7
    %v161 = vsub.s32 %v154, %v160
    %v162 = vrot.slane %v149, %v161
    %vm163 = vcmask 1041409
    %v164 = vsel %vm163, %v162, %v158
    %vm165 = vcmask 64512
    %v166 = vsel %vm165, %v164, 0
    %168 = vmatprep.subr.mxu0 0.0
    %169 = vmatpush1.msra.mxu0 %v150
    %170 = vmatprep.subr.mxu0 0.0
    %171 = vmatpush1.msra.mxu0 0.0
    %172 = vmatprep.subr.mxu0 0.0
    %173 = vmatpush1.msra.mxu0 0.0
    %174 = vmatprep.subr.mxu0 0.0
    %175 = vmatpush1.msra.mxu0 0.0
    %176 = vmatprep.subr.mxu0 0.0
    %177 = vmatpush1.msra.mxu0 0.0
    %178 = vmatprep.subr.mxu0 0.0
    %179 = vmatpush1.msra.mxu0 0.0
    %180 = vmatprep.subr.mxu0 0.0
    %181 = vmatpush1.msra.mxu0 0.0
    %182 = vmatprep.subr.mxu0 0.0
    %183 = vmatpush1.msra.mxu0 0.0
    %184 = vmatprep.subr.mxu0 0.0
    %185 = vmatpush1.msra.mxu0 0.0
    %186 = vmatprep.subr.mxu0 0.0
    %187 = vmatpush1.msra.mxu0 0.0
    %188 = vmatprep.subr.mxu0 0.0
    %189 = vmatpush1.msra.mxu0 0.0
    %190 = vmatprep.subr.mxu0 0.0
    %191 = vmatpush1.msra.mxu0 0.0
    %192 = vmatprep.subr.mxu0 0.0
    %193 = vmatpush1.msra.mxu0 0.0
    %194 = vmatprep.subr.mxu0 0.0
    %195 = vmatpush1.msra.mxu0 0.0
    %196 = vmatprep.subr.mxu0 0.0
    %197 = vmatpush1.msra.mxu0 0.0
    %198 = vmatprep.subr.mxu0 0.0
    %199 = vmatpush1.msra.mxu0 0.0
    %200 = vmatprep.subr.mxu0 0.0
    %201 = vmatpush1.msra.mxu0 0.0
    %202 = vmatprep.subr.mxu0 0.0
    %203 = vmatpush1.msra.mxu0 0.0
    %204 = vmatprep.subr.mxu0 0.0
    %205 = vmatpush1.msra.mxu0 0.0
    %206 = vmatprep.subr.mxu0 0.0
    %207 = vmatpush1.msra.mxu0 0.0
    %208 = vmatprep.subr.mxu0 0.0
    %209 = vmatpush1.msra.mxu0 0.0
    %210 = vmatprep.subr.mxu0 0.0
    %211 = vmatpush1.msra.mxu0 0.0
    %212 = vmatprep.subr.mxu0 0.0
    %213 = vmatpush1.msra.mxu0 0.0
    %214 = vmatprep.subr.mxu0 0.0
    %215 = vmatpush1.msra.mxu0 0.0
    %216 = vmatprep.subr.mxu0 0.0
    %217 = vmatpush1.msra.mxu0 0.0
    %218 = vmatprep.subr.mxu0 0.0
    %219 = vmatpush1.msra.mxu0 0.0
    %220 = vmatprep.subr.mxu0 0.0
    %221 = vmatpush1.msra.mxu0 0.0
    %222 = vmatprep.subr.mxu0 0.0
    %223 = vmatpush1.msra.mxu0 0.0
    %224 = vmatprep.subr.mxu0 0.0
    %225 = vmatpush1.msra.mxu0 0.0
    %226 = vmatprep.subr.mxu0 0.0
    %227 = vmatpush1.msra.mxu0 0.0
    %228 = vmatprep.subr.mxu0 0.0
    %229 = vmatpush1.msra.mxu0 0.0
    %230 = vmatprep.subr.mxu0 0.0
    %231 = vmatpush1.msra.mxu0 0.0
    %232 = vmatprep.mubr.f32.mxu0 0.0
    %233 = vmatmul.mubr.f32.gmra.mrb[0].mxu0 %v166
    %v234 = vpop.f32.mrb[0].mxu0
    %v235 = vadd.f32 0.0, %v234
    %v236 = vpop.f32.mrb[0].mxu0
    %237 = vdwg.mxu0
    %v238 = vadd.f32 %v114, %v235
    %v239 = vld [vmem:[#allocation5] sm:$0xff]
    %v240 = vld [vmem:[#allocation5 + $0x8] sm:$0xff]
    %v241 = vld [vmem:[#allocation5 + $0x10] sm:$0xff]
    %v242 = vld [vmem:[#allocation5 + $0x18] sm:$0xff]
    %v243 = vld [vmem:[#allocation5 + $0x20] sm:$0xff]
    %v244 = vld [vmem:[#allocation5 + $0x28] sm:$0xff]
    %v245 = vld [vmem:[#allocation5 + $0x30] sm:$0xff]
    %v246 = vld [vmem:[#allocation5 + $0x38] sm:$0xff]
    %v247 = vadd.f32 %v239, %v240
    %248 = vadd.xlane.f32.xlu0 %v247
    %v249 = vpop.xlane.xlu0 %248
    %v250 = vadd.f32 %v241, %v242
    %251 = vadd.xlane.f32.xlu0 %v250
    %v252 = vpop.xlane.xlu0 %251
    %v253 = vadd.f32 %v243, %v244
    %254 = vadd.xlane.f32.xlu0 %v253
    %v255 = vpop.xlane.xlu0 %254
    %v256 = vadd.f32 %v245, %v246
    %257 = vadd.xlane.f32.xlu0 %v256
    %v258 = vpop.xlane.xlu0 %257
    %v259 = vld [vmem:[#allocation11 + $0x8] sm:$0xff]
    %v260 = vld [vmem:[#allocation11 + $0x10] sm:$0xff]
    %v265 = vlaneseq
    %v266 = vshrl.u32 %v265, 7
    %v267 = vsub.s32 %v154, %v266
    %v268 = vrot.slane %v249, %v267
    %v269 = vadd.s32 %v154, 4294967288
    %v270 = vlaneseq
    %v271 = vshrl.u32 %v270, 7
    %v272 = vsub.s32 %v269, %v271
    %v273 = vrot.slane %v252, %v272
    %vm274 = vcmask 130112
    %v275 = vsel %vm274, %v273, %v268
    %v276 = vlaneseq
    %v277 = vshrl.u32 %v276, 7
    %v278 = vsub.s32 %v154, %v277
    %v279 = vrot.slane %v255, %v278
    %v280 = vlaneseq
    %v281 = vshrl.u32 %v280, 7
    %v282 = vsub.s32 %v269, %v281
    %v283 = vrot.slane %v258, %v282
    %v284 = vsel %vm274, %v283, %v279
    %v285 = vsel %vm163, %v284, %v275
    %vm286 = vcmask 130048
    %v287 = vsel %vm286, %v285, 0
    %289 = vmatprep.subr.mxu0 0.0
    %290 = vmatpush1.msra.mxu0 %v259
    %291 = vmatprep.subr.mxu0 0.0
    %292 = vmatpush1.msra.mxu0 %v260
    %293 = vmatprep.subr.mxu0 0.0
    %294 = vmatpush1.msra.mxu0 0.0
    %295 = vmatprep.subr.mxu0 0.0
    %296 = vmatpush1.msra.mxu0 0.0
    %297 = vmatprep.subr.mxu0 0.0
    %298 = vmatpush1.msra.mxu0 0.0
    %299 = vmatprep.subr.mxu0 0.0
    %300 = vmatpush1.msra.mxu0 0.0
    %301 = vmatprep.subr.mxu0 0.0
    %302 = vmatpush1.msra.mxu0 0.0
    %303 = vmatprep.subr.mxu0 0.0
    %304 = vmatpush1.msra.mxu0 0.0
    %305 = vmatprep.subr.mxu0 0.0
    %306 = vmatpush1.msra.mxu0 0.0
    %307 = vmatprep.subr.mxu0 0.0
    %308 = vmatpush1.msra.mxu0 0.0
    %309 = vmatprep.subr.mxu0 0.0
    %310 = vmatpush1.msra.mxu0 0.0
    %311 = vmatprep.subr.mxu0 0.0
    %312 = vmatpush1.msra.mxu0 0.0
    %313 = vmatprep.subr.mxu0 0.0
    %314 = vmatpush1.msra.mxu0 0.0
    %315 = vmatprep.subr.mxu0 0.0
    %316 = vmatpush1.msra.mxu0 0.0
    %317 = vmatprep.subr.mxu0 0.0
    %318 = vmatpush1.msra.mxu0 0.0
    %319 = vmatprep.subr.mxu0 0.0
    %320 = vmatpush1.msra.mxu0 0.0
    %321 = vmatprep.subr.mxu0 0.0
    %322 = vmatpush1.msra.mxu0 0.0
    %323 = vmatprep.subr.mxu0 0.0
    %324 = vmatpush1.msra.mxu0 0.0
    %325 = vmatprep.subr.mxu0 0.0
    %326 = vmatpush1.msra.mxu0 0.0
    %327 = vmatprep.subr.mxu0 0.0
    %328 = vmatpush1.msra.mxu0 0.0
    %329 = vmatprep.subr.mxu0 0.0
    %330 = vmatpush1.msra.mxu0 0.0
    %331 = vmatprep.subr.mxu0 0.0
    %332 = vmatpush1.msra.mxu0 0.0
    %333 = vmatprep.subr.mxu0 0.0
    %334 = vmatpush1.msra.mxu0 0.0
    %335 = vmatprep.subr.mxu0 0.0
    %336 = vmatpush1.msra.mxu0 0.0
    %337 = vmatprep.subr.mxu0 0.0
    %338 = vmatpush1.msra.mxu0 0.0
    %339 = vmatprep.subr.mxu0 0.0
    %340 = vmatpush1.msra.mxu0 0.0
    %341 = vmatprep.subr.mxu0 0.0
    %342 = vmatpush1.msra.mxu0 0.0
    %343 = vmatprep.subr.mxu0 0.0
    %344 = vmatpush1.msra.mxu0 0.0
    %345 = vmatprep.subr.mxu0 0.0
    %346 = vmatpush1.msra.mxu0 0.0
    %347 = vmatprep.subr.mxu0 0.0
    %348 = vmatpush1.msra.mxu0 0.0
    %349 = vmatprep.subr.mxu0 0.0
    %350 = vmatpush1.msra.mxu0 0.0
    %351 = vmatprep.subr.mxu0 0.0
    %352 = vmatpush1.msra.mxu0 0.0
    %353 = vmatprep.mubr.f32.mxu0 0.0
    %354 = vmatmul.mubr.f32.gmra.mrb[0].mxu0 %v287
    %v355 = vpop.f32.mrb[0].mxu0
    %v356 = vadd.f32 0.0, %v355
    %v357 = vpop.f32.mrb[0].mxu0
    %358 = vdwg.mxu0
    %v359 = vadd.f32 %v238, %v356
    %v360 = vld [vmem:[#allocation7] sm:$0xff]
    %v361 = vld [vmem:[#allocation7 + $0x8] sm:$0xff]
    %v362 = vld [vmem:[#allocation7 + $0x10] sm:$0xff]
    %v363 = vld [vmem:[#allocation7 + $0x18] sm:$0xff]
    %v364 = vld [vmem:[#allocation7 + $0x20] sm:$0xff]
    %v365 = vld [vmem:[#allocation7 + $0x28] sm:$0xff]
    %v366 = vld [vmem:[#allocation7 + $0x30] sm:$0xff]
    %v367 = vld [vmem:[#allocation7 + $0x38] sm:$0xff]
    %v368 = vld [vmem:[#allocation7 + $0x40] sm:$0xff]
    %v369 = vld [vmem:[#allocation7 + $0x48] sm:$0xff]
    %v370 = vld [vmem:[#allocation7 + $0x50] sm:$0xff]
    %v371 = vld [vmem:[#allocation7 + $0x58] sm:$0xff]
    %v372 = vadd.f32 %v360, %v361
    %373 = vadd.xlane.f32.xlu0 %v372
    %v374 = vpop.xlane.xlu0 %373
    %v375 = vadd.f32 %v362, %v363
    %376 = vadd.xlane.f32.xlu0 %v375
    %v377 = vpop.xlane.xlu0 %376
    %v378 = vadd.f32 %v364, %v365
    %379 = vadd.xlane.f32.xlu0 %v378
    %v380 = vpop.xlane.xlu0 %379
    %v381 = vadd.f32 %v366, %v367
    %382 = vadd.xlane.f32.xlu0 %v381
    %v383 = vpop.xlane.xlu0 %382
    %v384 = vadd.f32 %v368, %v369
    %385 = vadd.xlane.f32.xlu0 %v384
    %v386 = vpop.xlane.xlu0 %385
    %v387 = vadd.f32 %v370, %v371
    %388 = vadd.xlane.f32.xlu0 %v387
    %v389 = vpop.xlane.xlu0 %388
    %v390 = vld [vmem:[#allocation11 + $0x18] sm:$0xff]
    %v391 = vld [vmem:[#allocation11 + $0x20] sm:$0xff]
    %v392 = vld [vmem:[#allocation11 + $0x28] sm:$0xff]
    %v399 = vlaneseq
    %v400 = vshrl.u32 %v399, 7
    %v401 = vsub.s32 %v154, %v400
    %v402 = vrot.slane %v374, %v401
    %v403 = vlaneseq
    %v404 = vshrl.u32 %v403, 7
    %v405 = vsub.s32 %v269, %v404
    %v406 = vrot.slane %v377, %v405
    %v407 = vsel %vm274, %v406, %v402
    %v408 = vadd.s32 %v154, 4294967280
    %v409 = vlaneseq
    %v410 = vshrl.u32 %v409, 7
    %v411 = vsub.s32 %v408, %v410
    %v412 = vrot.slane %v380, %v411
    %vm413 = vcmask 195712
    %v414 = vsel %vm413, %v412, %v407
    %v415 = vlaneseq
    %v416 = vshrl.u32 %v415, 7
    %v417 = vsub.s32 %v154, %v416
    %v418 = vrot.slane %v383, %v417
    %v419 = vlaneseq
    %v420 = vshrl.u32 %v419, 7
    %v421 = vsub.s32 %v269, %v420
    %v422 = vrot.slane %v386, %v421
    %v423 = vsel %vm274, %v422, %v418
    %v424 = vlaneseq
    %v425 = vshrl.u32 %v424, 7
    %v426 = vsub.s32 %v408, %v425
    %v427 = vrot.slane %v389, %v426
    %v428 = vsel %vm413, %v427, %v423
    %v429 = vsel %vm163, %v428, %v414
    %vm430 = vcmask 195584
    %v431 = vsel %vm430, %v429, 0
    %433 = vmatprep.subr.mxu0 0.0
    %434 = vmatpush1.msra.mxu0 %v390
    %435 = vmatprep.subr.mxu0 0.0
    %436 = vmatpush1.msra.mxu0 %v391
    %437 = vmatprep.subr.mxu0 0.0
    %438 = vmatpush1.msra.mxu0 %v392
    %439 = vmatprep.subr.mxu0 0.0
    %440 = vmatpush1.msra.mxu0 0.0
    %441 = vmatprep.subr.mxu0 0.0
    %442 = vmatpush1.msra.mxu0 0.0
    %443 = vmatprep.subr.mxu0 0.0
    %444 = vmatpush1.msra.mxu0 0.0
    %445 = vmatprep.subr.mxu0 0.0
    %446 = vmatpush1.msra.mxu0 0.0
    %447 = vmatprep.subr.mxu0 0.0
    %448 = vmatpush1.msra.mxu0 0.0
    %449 = vmatprep.subr.mxu0 0.0
    %450 = vmatpush1.msra.mxu0 0.0
    %451 = vmatprep.subr.mxu0 0.0
    %452 = vmatpush1.msra.mxu0 0.0
    %453 = vmatprep.subr.mxu0 0.0
    %454 = vmatpush1.msra.mxu0 0.0
    %455 = vmatprep.subr.mxu0 0.0
    %456 = vmatpush1.msra.mxu0 0.0
    %457 = vmatprep.subr.mxu0 0.0
    %458 = vmatpush1.msra.mxu0 0.0
    %459 = vmatprep.subr.mxu0 0.0
    %460 = vmatpush1.msra.mxu0 0.0
    %461 = vmatprep.subr.mxu0 0.0
    %462 = vmatpush1.msra.mxu0 0.0
    %463 = vmatprep.subr.mxu0 0.0
    %464 = vmatpush1.msra.mxu0 0.0
    %465 = vmatprep.subr.mxu0 0.0
    %466 = vmatpush1.msra.mxu0 0.0
    %467 = vmatprep.subr.mxu0 0.0
    %468 = vmatpush1.msra.mxu0 0.0
    %469 = vmatprep.subr.mxu0 0.0
    %470 = vmatpush1.msra.mxu0 0.0
    %471 = vmatprep.subr.mxu0 0.0
    %472 = vmatpush1.msra.mxu0 0.0
    %473 = vmatprep.subr.mxu0 0.0
    %474 = vmatpush1.msra.mxu0 0.0
    %475 = vmatprep.subr.mxu0 0.0
    %476 = vmatpush1.msra.mxu0 0.0
    %477 = vmatprep.subr.mxu0 0.0
    %478 = vmatpush1.msra.mxu0 0.0
    %479 = vmatprep.subr.mxu0 0.0
    %480 = vmatpush1.msra.mxu0 0.0
    %481 = vmatprep.subr.mxu0 0.0
    %482 = vmatpush1.msra.mxu0 0.0
    %483 = vmatprep.subr.mxu0 0.0
    %484 = vmatpush1.msra.mxu0 0.0
    %485 = vmatprep.subr.mxu0 0.0
    %486 = vmatpush1.msra.mxu0 0.0
    %487 = vmatprep.subr.mxu0 0.0
    %488 = vmatpush1.msra.mxu0 0.0
    %489 = vmatprep.subr.mxu0 0.0
    %490 = vmatpush1.msra.mxu0 0.0
    %491 = vmatprep.subr.mxu0 0.0
    %492 = vmatpush1.msra.mxu0 0.0
    %493 = vmatprep.subr.mxu0 0.0
    %494 = vmatpush1.msra.mxu0 0.0
    %495 = vmatprep.subr.mxu0 0.0
    %496 = vmatpush1.msra.mxu0 0.0
    %497 = vmatprep.mubr.f32.mxu0 0.0
    %498 = vmatmul.mubr.f32.gmra.mrb[0].mxu0 %v431
    %v499 = vpop.f32.mrb[0].mxu0
    %v500 = vadd.f32 0.0, %v499
    %v501 = vpop.f32.mrb[0].mxu0
    %502 = vdwg.mxu0
    %v503 = vadd.f32 %v359, %v500
    %v504 = vld [vmem:[#allocation8] sm:$0xff]
    %v505 = vld [vmem:[#allocation8 + $0x8] sm:$0xff]
    %v506 = vld [vmem:[#allocation8 + $0x10] sm:$0xff]
    %v507 = vld [vmem:[#allocation8 + $0x18] sm:$0xff]
    %v508 = vld [vmem:[#allocation8 + $0x20] sm:$0xff]
    %v509 = vld [vmem:[#allocation8 + $0x28] sm:$0xff]
    %v510 = vld [vmem:[#allocation8 + $0x30] sm:$0xff]
    %v511 = vld [vmem:[#allocation8 + $0x38] sm:$0xff]
    %vm512 = vcmask 523264
    %v513 = vsel %vm512, %v504, 0.0
    %514 = vadd.xlane.f32.xlu0 %v513
    %v515 = vpop.xlane.xlu0 %514
    %v516 = vsel %vm512, %v505, 0.0
    %517 = vadd.xlane.f32.xlu0 %v516
    %v518 = vpop.xlane.xlu0 %517
    %v519 = vsel %vm512, %v506, 0.0
    %520 = vadd.xlane.f32.xlu0 %v519
    %v521 = vpop.xlane.xlu0 %520
    %v522 = vsel %vm512, %v507, 0.0
    %523 = vadd.xlane.f32.xlu0 %v522
    %v524 = vpop.xlane.xlu0 %523
    %v525 = vsel %vm512, %v508, 0.0
    %526 = vadd.xlane.f32.xlu0 %v525
    %v527 = vpop.xlane.xlu0 %526
    %v528 = vsel %vm512, %v509, 0.0
    %529 = vadd.xlane.f32.xlu0 %v528
    %v530 = vpop.xlane.xlu0 %529
    %v531 = vsel %vm512, %v510, 0.0
    %532 = vadd.xlane.f32.xlu0 %v531
    %v533 = vpop.xlane.xlu0 %532
    %v534 = vsel %vm512, %v511, 0.0
    %535 = vadd.xlane.f32.xlu0 %v534
    %v536 = vpop.xlane.xlu0 %535
    %v537 = vld [vmem:[#allocation11 + $0x30] sm:$0xff]
    %v538 = vld [vmem:[#allocation11 + $0x38] sm:$0xff]
    %v539 = vld [vmem:[#allocation11 + $0x40] sm:$0xff]
    %v540 = vld [vmem:[#allocation11 + $0x48] sm:$0xff]
    %v549 = vlaneseq
    %v550 = vshrl.u32 %v549, 7
    %v551 = vsub.s32 %v154, %v550
    %v552 = vrot.slane %v515, %v551
    %v553 = vlaneseq
    %v554 = vshrl.u32 %v553, 7
    %v555 = vsub.s32 %v269, %v554
    %v556 = vrot.slane %v518, %v555
    %v557 = vsel %vm274, %v556, %v552
    %v558 = vlaneseq
    %v559 = vshrl.u32 %v558, 7
    %v560 = vsub.s32 %v408, %v559
    %v561 = vrot.slane %v521, %v560
    %v562 = vsel %vm413, %v561, %v557
    %v563 = vadd.s32 %v154, 4294967272
    %v564 = vlaneseq
    %v565 = vshrl.u32 %v564, 7
    %v566 = vsub.s32 %v563, %v565
    %v567 = vrot.slane %v524, %v566
    %vm568 = vcmask 261312
    %v569 = vsel %vm568, %v567, %v562
    %v570 = vlaneseq
    %v571 = vshrl.u32 %v570, 7
    %v572 = vsub.s32 %v154, %v571
    %v573 = vrot.slane %v527, %v572
    %v574 = vlaneseq
    %v575 = vshrl.u32 %v574, 7
    %v576 = vsub.s32 %v269, %v575
    %v577 = vrot.slane %v530, %v576
    %v578 = vsel %vm274, %v577, %v573
    %v579 = vlaneseq
    %v580 = vshrl.u32 %v579, 7
    %v581 = vsub.s32 %v408, %v580
    %v582 = vrot.slane %v533, %v581
    %v583 = vsel %vm413, %v582, %v578
    %v584 = vlaneseq
    %v585 = vshrl.u32 %v584, 7
    %v586 = vsub.s32 %v563, %v585
    %v587 = vrot.slane %v536, %v586
    %v588 = vsel %vm568, %v587, %v583
    %v589 = vsel %vm163, %v588, %v569
    %vm590 = vcmask 261120
    %v591 = vsel %vm590, %v589, 0
    %593 = vmatprep.subr.mxu0 0.0
    %594 = vmatpush1.msra.mxu0 %v537
    %595 = vmatprep.subr.mxu0 0.0
    %596 = vmatpush1.msra.mxu0 %v538
    %597 = vmatprep.subr.mxu0 0.0
    %598 = vmatpush1.msra.mxu0 %v539
    %599 = vmatprep.subr.mxu0 0.0
    %600 = vmatpush1.msra.mxu0 %v540
    %601 = vmatprep.subr.mxu0 0.0
    %602 = vmatpush1.msra.mxu0 0.0
    %603 = vmatprep.subr.mxu0 0.0
    %604 = vmatpush1.msra.mxu0 0.0
    %605 = vmatprep.subr.mxu0 0.0
    %606 = vmatpush1.msra.mxu0 0.0
    %607 = vmatprep.subr.mxu0 0.0
    %608 = vmatpush1.msra.mxu0 0.0
    %609 = vmatprep.subr.mxu0 0.0
    %610 = vmatpush1.msra.mxu0 0.0
    %611 = vmatprep.subr.mxu0 0.0
    %612 = vmatpush1.msra.mxu0 0.0
    %613 = vmatprep.subr.mxu0 0.0
    %614 = vmatpush1.msra.mxu0 0.0
    %615 = vmatprep.subr.mxu0 0.0
    %616 = vmatpush1.msra.mxu0 0.0
    %617 = vmatprep.subr.mxu0 0.0
    %618 = vmatpush1.msra.mxu0 0.0
    %619 = vmatprep.subr.mxu0 0.0
    %620 = vmatpush1.msra.mxu0 0.0
    %621 = vmatprep.subr.mxu0 0.0
    %622 = vmatpush1.msra.mxu0 0.0
    %623 = vmatprep.subr.mxu0 0.0
    %624 = vmatpush1.msra.mxu0 0.0
    %625 = vmatprep.subr.mxu0 0.0
    %626 = vmatpush1.msra.mxu0 0.0
    %627 = vmatprep.subr.mxu0 0.0
    %628 = vmatpush1.msra.mxu0 0.0
    %629 = vmatprep.subr.mxu0 0.0
    %630 = vmatpush1.msra.mxu0 0.0
    %631 = vmatprep.subr.mxu0 0.0
    %632 = vmatpush1.msra.mxu0 0.0
    %633 = vmatprep.subr.mxu0 0.0
    %634 = vmatpush1.msra.mxu0 0.0
    %635 = vmatprep.subr.mxu0 0.0
    %636 = vmatpush1.msra.mxu0 0.0
    %637 = vmatprep.subr.mxu0 0.0
    %638 = vmatpush1.msra.mxu0 0.0
    %639 = vmatprep.subr.mxu0 0.0
    %640 = vmatpush1.msra.mxu0 0.0
    %641 = vmatprep.subr.mxu0 0.0
    %642 = vmatpush1.msra.mxu0 0.0
    %643 = vmatprep.subr.mxu0 0.0
    %644 = vmatpush1.msra.mxu0 0.0
    %645 = vmatprep.subr.mxu0 0.0
    %646 = vmatpush1.msra.mxu0 0.0
    %647 = vmatprep.subr.mxu0 0.0
    %648 = vmatpush1.msra.mxu0 0.0
    %649 = vmatprep.subr.mxu0 0.0
    %650 = vmatpush1.msra.mxu0 0.0
    %651 = vmatprep.subr.mxu0 0.0
    %652 = vmatpush1.msra.mxu0 0.0
    %653 = vmatprep.subr.mxu0 0.0
    %654 = vmatpush1.msra.mxu0 0.0
    %655 = vmatprep.subr.mxu0 0.0
    %656 = vmatpush1.msra.mxu0 0.0
    %657 = vmatprep.mubr.f32.mxu0 0.0
    %658 = vmatmul.mubr.f32.gmra.mrb[0].mxu0 %v591
    %v659 = vpop.f32.mrb[0].mxu0
    %v660 = vadd.f32 0.0, %v659
    %v661 = vpop.f32.mrb[0].mxu0
    %662 = vdwg.mxu0
    %v663 = vadd.f32 %v503, %v660
    %v664 = vld [vmem:[#allocation10] sm:$0xff]
    %v665 = vld [vmem:[#allocation10 + $0x8] sm:$0xff]
    %v666 = vld [vmem:[#allocation10 + $0x10] sm:$0xff]
    %v667 = vld [vmem:[#allocation10 + $0x18] sm:$0xff]
    %v668 = vld [vmem:[#allocation10 + $0x20] sm:$0xff]
    %v669 = vld [vmem:[#allocation10 + $0x28] sm:$0xff]
    %v670 = vld [vmem:[#allocation10 + $0x30] sm:$0xff]
    %v671 = vld [vmem:[#allocation10 + $0x38] sm:$0xff]
    %v672 = vld [vmem:[#allocation10 + $0x40] sm:$0xff]
    %v673 = vld [vmem:[#allocation10 + $0x48] sm:$0xff]
    %v674 = vld [vmem:[#allocation10 + $0x50] sm:$0xff]
    %v675 = vld [vmem:[#allocation10 + $0x58] sm:$0xff]
    %v676 = vsel %vm512, %v664, 0.0
    %677 = vadd.xlane.f32.xlu0 %v676
    %v678 = vpop.xlane.xlu0 %677
    %v679 = vsel %vm512, %v665, 0.0
    %680 = vadd.xlane.f32.xlu0 %v679
    %v681 = vpop.xlane.xlu0 %680
    %v682 = vsel %vm512, %v666, 0.0
    %683 = vadd.xlane.f32.xlu0 %v682
    %v684 = vpop.xlane.xlu0 %683
    %v685 = vsel %vm512, %v667, 0.0
    %686 = vadd.xlane.f32.xlu0 %v685
    %v687 = vpop.xlane.xlu0 %686
    %v688 = vsel %vm512, %v668, 0.0
    %689 = vadd.xlane.f32.xlu0 %v688
    %v690 = vpop.xlane.xlu0 %689
    %v691 = vsel %vm512, %v669, 0.0
    %692 = vadd.xlane.f32.xlu0 %v691
    %v693 = vpop.xlane.xlu0 %692
    %v694 = vsel %vm512, %v670, 0.0
    %695 = vadd.xlane.f32.xlu0 %v694
    %v696 = vpop.xlane.xlu0 %695
    %v697 = vsel %vm512, %v671, 0.0
    %698 = vadd.xlane.f32.xlu0 %v697
    %v699 = vpop.xlane.xlu0 %698
    %v700 = vsel %vm512, %v672, 0.0
    %701 = vadd.xlane.f32.xlu0 %v700
    %v702 = vpop.xlane.xlu0 %701
    %v703 = vsel %vm512, %v673, 0.0
    %704 = vadd.xlane.f32.xlu0 %v703
    %v705 = vpop.xlane.xlu0 %704
    %v706 = vsel %vm512, %v674, 0.0
    %707 = vadd.xlane.f32.xlu0 %v706
    %v708 = vpop.xlane.xlu0 %707
    %v709 = vsel %vm512, %v675, 0.0
    %710 = vadd.xlane.f32.xlu0 %v709
    %v711 = vpop.xlane.xlu0 %710
    %v712 = vld [vmem:[#allocation11 + $0x50] sm:$0xff]
    %v713 = vld [vmem:[#allocation11 + $0x58] sm:$0xff]
    %v714 = vld [vmem:[#allocation11 + $0x60] sm:$0xff]
    %v715 = vld [vmem:[#allocation11 + $0x68] sm:$0xff]
    %v716 = vld [vmem:[#allocation11 + $0x70] sm:$0xff]
    %v717 = vld [vmem:[#allocation11 + $0x78] sm:$0xff]
    %v730 = vlaneseq
    %v731 = vshrl.u32 %v730, 7
    %v732 = vsub.s32 %v154, %v731
    %v733 = vrot.slane %v678, %v732
    %v734 = vlaneseq
    %v735 = vshrl.u32 %v734, 7
    %v736 = vsub.s32 %v269, %v735
    %v737 = vrot.slane %v681, %v736
    %v738 = vsel %vm274, %v737, %v733
    %v739 = vlaneseq
    %v740 = vshrl.u32 %v739, 7
    %v741 = vsub.s32 %v408, %v740
    %v742 = vrot.slane %v684, %v741
    %v743 = vsel %vm413, %v742, %v738
    %v744 = vlaneseq
    %v745 = vshrl.u32 %v744, 7
    %v746 = vsub.s32 %v563, %v745
    %v747 = vrot.slane %v687, %v746
    %v748 = vsel %vm568, %v747, %v743
    %v749 = vadd.s32 %v154, 4294967264
    %v750 = vlaneseq
    %v751 = vshrl.u32 %v750, 7
    %v752 = vsub.s32 %v749, %v751
    %v753 = vrot.slane %v690, %v752
    %vm754 = vcmask 326912
    %v755 = vsel %vm754, %v753, %v748
    %v756 = vadd.s32 %v154, 4294967256
    %v757 = vlaneseq
    %v758 = vshrl.u32 %v757, 7
    %v759 = vsub.s32 %v756, %v758
    %v760 = vrot.slane %v693, %v759
    %vm761 = vcmask 392512
    %v762 = vsel %vm761, %v760, %v755
    %v763 = vlaneseq
    %v764 = vshrl.u32 %v763, 7
    %v765 = vsub.s32 %v154, %v764
    %v766 = vrot.slane %v696, %v765
    %v767 = vlaneseq
    %v768 = vshrl.u32 %v767, 7
    %v769 = vsub.s32 %v269, %v768
    %v770 = vrot.slane %v699, %v769
    %v771 = vsel %vm274, %v770, %v766
    %v772 = vlaneseq
    %v773 = vshrl.u32 %v772, 7
    %v774 = vsub.s32 %v408, %v773
    %v775 = vrot.slane %v702, %v774
    %v776 = vsel %vm413, %v775, %v771
    %v777 = vlaneseq
    %v778 = vshrl.u32 %v777, 7
    %v779 = vsub.s32 %v563, %v778
    %v780 = vrot.slane %v705, %v779
    %v781 = vsel %vm568, %v780, %v776
    %v782 = vlaneseq
    %v783 = vshrl.u32 %v782, 7
    %v784 = vsub.s32 %v749, %v783
    %v785 = vrot.slane %v708, %v784
    %v786 = vsel %vm754, %v785, %v781
    %v787 = vlaneseq
    %v788 = vshrl.u32 %v787, 7
    %v789 = vsub.s32 %v756, %v788
    %v790 = vrot.slane %v711, %v789
    %v791 = vsel %vm761, %v790, %v786
    %v792 = vsel %vm163, %v791, %v762
    %vm793 = vcmask 392192
    %v794 = vsel %vm793, %v792, 0
    %796 = vmatprep.subr.mxu0 0.0
    %797 = vmatpush1.msra.mxu0 %v712
    %798 = vmatprep.subr.mxu0 0.0
    %799 = vmatpush1.msra.mxu0 %v713
    %800 = vmatprep.subr.mxu0 0.0
    %801 = vmatpush1.msra.mxu0 %v714
    %802 = vmatprep.subr.mxu0 0.0
    %803 = vmatpush1.msra.mxu0 %v715
    %804 = vmatprep.subr.mxu0 0.0
    %805 = vmatpush1.msra.mxu0 %v716
    %806 = vmatprep.subr.mxu0 0.0
    %807 = vmatpush1.msra.mxu0 %v717
    %808 = vmatprep.subr.mxu0 0.0
    %809 = vmatpush1.msra.mxu0 0.0
    %810 = vmatprep.subr.mxu0 0.0
    %811 = vmatpush1.msra.mxu0 0.0
    %812 = vmatprep.subr.mxu0 0.0
    %813 = vmatpush1.msra.mxu0 0.0
    %814 = vmatprep.subr.mxu0 0.0
    %815 = vmatpush1.msra.mxu0 0.0
    %816 = vmatprep.subr.mxu0 0.0
    %817 = vmatpush1.msra.mxu0 0.0
    %818 = vmatprep.subr.mxu0 0.0
    %819 = vmatpush1.msra.mxu0 0.0
    %820 = vmatprep.subr.mxu0 0.0
    %821 = vmatpush1.msra.mxu0 0.0
    %822 = vmatprep.subr.mxu0 0.0
    %823 = vmatpush1.msra.mxu0 0.0
    %824 = vmatprep.subr.mxu0 0.0
    %825 = vmatpush1.msra.mxu0 0.0
    %826 = vmatprep.subr.mxu0 0.0
    %827 = vmatpush1.msra.mxu0 0.0
    %828 = vmatprep.subr.mxu0 0.0
    %829 = vmatpush1.msra.mxu0 0.0
    %830 = vmatprep.subr.mxu0 0.0
    %831 = vmatpush1.msra.mxu0 0.0
    %832 = vmatprep.subr.mxu0 0.0
    %833 = vmatpush1.msra.mxu0 0.0
    %834 = vmatprep.subr.mxu0 0.0
    %835 = vmatpush1.msra.mxu0 0.0
    %836 = vmatprep.subr.mxu0 0.0
    %837 = vmatpush1.msra.mxu0 0.0
    %838 = vmatprep.subr.mxu0 0.0
    %839 = vmatpush1.msra.mxu0 0.0
    %840 = vmatprep.subr.mxu0 0.0
    %841 = vmatpush1.msra.mxu0 0.0
    %842 = vmatprep.subr.mxu0 0.0
    %843 = vmatpush1.msra.mxu0 0.0
    %844 = vmatprep.subr.mxu0 0.0
    %845 = vmatpush1.msra.mxu0 0.0
    %846 = vmatprep.subr.mxu0 0.0
    %847 = vmatpush1.msra.mxu0 0.0
    %848 = vmatprep.subr.mxu0 0.0
    %849 = vmatpush1.msra.mxu0 0.0
    %850 = vmatprep.subr.mxu0 0.0
    %851 = vmatpush1.msra.mxu0 0.0
    %852 = vmatprep.subr.mxu0 0.0
    %853 = vmatpush1.msra.mxu0 0.0
    %854 = vmatprep.subr.mxu0 0.0
    %855 = vmatpush1.msra.mxu0 0.0
    %856 = vmatprep.subr.mxu0 0.0
    %857 = vmatpush1.msra.mxu0 0.0
    %858 = vmatprep.subr.mxu0 0.0
    %859 = vmatpush1.msra.mxu0 0.0
    %860 = vmatprep.mubr.f32.mxu0 0.0
    %861 = vmatmul.mubr.f32.gmra.mrb[0].mxu0 %v794
    %v862 = vpop.f32.mrb[0].mxu0
    %v863 = vadd.f32 0.0, %v862
    %v864 = vpop.f32.mrb[0].mxu0
    %865 = vdwg.mxu0
    %v866 = vadd.f32 %v663, %v863
    %v867 = vxor.u32 %v866, 2147483648
    %v868 = vmul.f32 %v867, 1.442695
    %v869 = vpow.pop %v868
    %v870 = vadd.f32 %v869, 1.0
    %v871 = vrcp.pop %v870
    %v872 = vmul.f32 1.0, %v871
    %873 = vst [vmem:[#allocation13] sm:$0x3] %v872
    // Predicated region
    $region54: #{tpu_custom_call.1} parent=1 // pred_check
      _
    $region55: #{tpu_custom_call.1} parent=1 // pred_check_branch
      %875 = sbr.rel (0) target = $region57
    $region56: #{tpu_custom_call.1} parent=1 // pred_region
      %s877 = ssub.s32 32, 32
      %878 = vsyncadd [#allocation4], %s877
      %s880 = sshll.u32 [#allocation13], 4
      %s881 = int_to_ptr.vmem [resolvable:$true] %s880
      %883 = dma.vmem_to_hbm [thread:$0]  %s881, 32, %s7, [#allocation4]
    $region57: #{tpu_custom_call.1} parent=1 // pred_fallthru
      _
    // Predicated region
    $region58: #{tpu_custom_call.1} parent=1 // pred_check
      _
    $region59: #{tpu_custom_call.1} parent=1 // pred_check_branch
      %885 = sbr.rel (0) target = $region61
    $region60: #{tpu_custom_call.1} parent=1 // pred_region
      %886 = dma.done [#allocation4], 32
    $region61: #{tpu_custom_call.1} parent=1 // pred_fallthru
      _
    %887 = vsyncpa [#allocation3], 1
    %888 = vsyncpa [#allocation6], 1
    %889 = vsyncpa [#allocation9], 1
    %890 = vsyncpa [#allocation12], 1
    %891 = vsyncpa [#allocation4], 1

</llo_original>
